<compile_context>
chip_gen: v7x
topology: tpu7x:2x2x1
jax: 0.10.0
libtpu: 0.0.40
codegen_flags: <defaults>
</compile_context>

<pallas_src>
import functools

import jax
import jax.numpy as jnp
from jax.experimental import pallas as pl
from jax.experimental.pallas import tpu as pltpu


def _round_up(x, m):
    return ((x + m - 1) // m) * m


def _choose_tile_b(B):
    """Batch tile: big tiles amortize ~0.35us/step overhead; >=2 steps when
    B >= 256 so v7x's two TensorCores both get work."""
    MAX_TILE = 512
    if B >= 2 * MAX_TILE:
        return MAX_TILE
    if B >= 256:
        return _round_up((B + 1) // 2, 8)
    return _round_up(max(B, 8), 8)


def _dqn_fused_kernel(*refs, n_layers, n_actions):
    """Fused MLP: o = (W_L(... relu(W_2 relu(W_1 x + b_1) + b_2) ...) + b_L)[:, :n_actions]."""
    x_ref = refs[0]
    o_ref = refs[-1]
    wb_refs = refs[1:-1]  # alternating (w, b) refs, all VMEM-resident
    h = x_ref[...]
    for i in range(n_layers):
        w_ref = wb_refs[2 * i]
        b_ref = wb_refs[2 * i + 1]
        # f32 accumulation on the MXU regardless of param dtype (bf16 by default).
        y = jnp.dot(h, w_ref[...], preferred_element_type=jnp.float32)
        y = y + b_ref[...]  # b_ref is (1, out_pad) f32 -> broadcasts over rows
        if i != n_layers - 1:
            y = jnp.maximum(y, 0.0)        # ReLU on the f32 accumulator
            h = y.astype(w_ref.dtype)      # next dot in param dtype
        else:
            h = y
    # Only the first n_actions columns are real (padded columns are exactly 0);
    # store the narrow block so the HBM writeback is n_actions wide, not 128.
    o_ref[...] = h[:, :n_actions].astype(o_ref.dtype)


def init_dqn_params(key, state_dims, hidden_dims, n_actions):
    """PyTorch nn.Linear-style init: U[-1/sqrt(fan_in), 1/sqrt(fan_in)] (f32 masters).

    Weights are stored [in_features, out_features] so the kernel does x @ w.
    """
    dims = [state_dims] + list(hidden_dims) + [n_actions]
    params = []
    for i in range(len(dims) - 1):
        fan_in, fan_out = dims[i], dims[i + 1]
        key, kw, kb = jax.random.split(key, 3)
        bound = 1.0 / float(fan_in) ** 0.5
        w = jax.random.uniform(kw, (fan_in, fan_out), jnp.float32, -bound, bound)
        b = jax.random.uniform(kb, (fan_out,), jnp.float32, -bound, bound)
        params.append((w, b))
    return params


def prepare_dqn_params(params, compute_dtype=jnp.bfloat16):
    """One-time layout prep (kept OUT of the per-forward-call path):
      - every layer's output width zero-padded to a multiple of 128 (and the
        next layer's input rows padded to match), so all in-kernel tiles are
        lane-dense,
      - weights cast to `compute_dtype` (bf16 by default) for the MXU,
      - biases kept f32, reshaped to (1, out_pad) for in-kernel broadcast."""
    prepared = []
    n_actions = params[-1][0].shape[1]
    prev_out_pad = None
    for i, (w, b) in enumerate(params):
        fan_in, fan_out = w.shape
        in_pad = fan_in if i == 0 else prev_out_pad
        out_pad = _round_up(fan_out, 128)
        w_p = jnp.zeros((in_pad, out_pad), compute_dtype)
        w_p = w_p.at[:fan_in, :fan_out].set(w.astype(compute_dtype))
        b_p = jnp.zeros((1, out_pad), jnp.float32)
        b_p = b_p.at[0, :fan_out].set(b.astype(jnp.float32))
        prepared.append((w_p, b_p))
        prev_out_pad = out_pad
    return tuple(prepared), n_actions


@functools.partial(jax.jit, static_argnames=("n_actions",))
def dqn_forward(prepared_params, state, *, n_actions):
    """Forward pass of DQN: one fused Pallas kernel over a parallel batch grid."""
    n_layers = len(prepared_params)
    B, state_dims = state.shape
    compute_dtype = prepared_params[0][0].dtype

    tile_b = _choose_tile_b(B)
    grid_b = -(-B // tile_b)          # cdiv
    b_pad = grid_b * tile_b

    x = state.astype(compute_dtype)   # bf16 MXU input by default (halves HBM read)
    if b_pad != B:
        x = jnp.pad(x, ((0, b_pad - B), (0, 0)))

    in_specs = [pl.BlockSpec((tile_b, state_dims), lambda i: (i, 0))]
    flat_inputs = [x]
    for (w, b2d) in prepared_params:
        in_specs.append(pl.BlockSpec(w.shape, lambda i: (0, 0)))     # VMEM-resident
        in_specs.append(pl.BlockSpec(b2d.shape, lambda i: (0, 0)))   # VMEM-resident
        flat_inputs.append(w)
        flat_inputs.append(b2d)

    # Explicit VMEM budget: 2x (double-buffered) params + IO tiles + headroom,
    # capped so the same code stays safe on v7x's 64 MiB VMEM.
    param_bytes = sum(int(w.size) * w.dtype.itemsize + int(b.size) * b.dtype.itemsize
                      for w, b in prepared_params)
    io_bytes = tile_b * state_dims * x.dtype.itemsize + tile_b * n_actions * 4
    vmem_limit = int(min(2 * (param_bytes + io_bytes) + (8 << 20), 64 << 20))

    kernel = functools.partial(_dqn_fused_kernel, n_layers=n_layers,
                               n_actions=n_actions)
    out = pl.pallas_call(
        kernel,
        out_shape=jax.ShapeDtypeStruct((b_pad, n_actions), jnp.float32),
        grid=(grid_b,),
        in_specs=in_specs,
        out_specs=pl.BlockSpec((tile_b, n_actions), lambda i: (i, 0)),
        compiler_params=pltpu.CompilerParams(
            dimension_semantics=("parallel",),   # splits batch across TCs on v7x
            vmem_limit_bytes=vmem_limit),
    )(*flat_inputs)

    if b_pad != B:
        out = out[:B]
    return out


def _reference_forward(params, state):
    """Plain-JAX reference of the same math (f32 throughout, unpadded params)."""
    x = state
    for i, (w, b) in enumerate(params):
        x = x @ w.astype(jnp.float32) + b.astype(jnp.float32)
        if i != len(params) - 1:
            x = jnp.maximum(x, 0.0)
    return x


if __name__ == "__main__":
    # Small shapes consistent with the module: state_dims=16, hidden_dims=[32, 64],
    # n_actions=4.
    state_dims = 16
    hidden_dims = [32, 64]
    n_actions = 4

    key = jax.random.PRNGKey(0)
    key, k_small, k_ragged, k_big = jax.random.split(key, 4)

    params = init_dqn_params(key, state_dims, hidden_dims, n_actions)
    prep_f32, n_act = prepare_dqn_params(params, compute_dtype=jnp.float32)
    prep_bf16, _ = prepare_dqn_params(params, compute_dtype=jnp.bfloat16)

    # Case 1: tiny batch (single grid step), f32 path -> tight tolerance.
    state_small = jax.random.normal(k_small, (8, state_dims), jnp.float32)
    q_small = jax.block_until_ready(dqn_forward(prep_f32, state_small, n_actions=n_act))
    ref_small = _reference_forward(params, state_small)
    assert q_small.shape == (8, n_actions)
    assert jnp.allclose(q_small, ref_small, atol=1e-5, rtol=1e-5)

    # Case 2: ragged batch (B=100) exercising pad-to-tile + row slice, f32 path.
    state_ragged = jax.random.normal(k_ragged, (100, state_dims), jnp.float32)
    q_ragged = jax.block_until_ready(dqn_forward(prep_f32, state_ragged, n_actions=n_act))
    ref_ragged = _reference_forward(params, state_ragged)
    assert q_ragged.shape == (100, n_actions)
    assert jnp.allclose(q_ragged, ref_ragged, atol=1e-5, rtol=1e-5)

    # Case 3: larger batch exercising the 2-step parallel grid, f32 path.
    state_big = jax.random.normal(k_big, (512, state_dims), jnp.float32)
    q_big = jax.block_until_ready(dqn_forward(prep_f32, state_big, n_actions=n_act))
    ref_big = _reference_forward(params, state_big)
    assert q_big.shape == (512, n_actions)
    assert jnp.allclose(q_big, ref_big, atol=1e-5, rtol=1e-5)

    # Case 4: default bf16 MXU path (f32 accumulation/bias/ReLU in-kernel);
    # compared against the f32 reference with bf16-appropriate tolerance.
    q_bf16 = jax.block_until_ready(dqn_forward(prep_bf16, state_big, n_actions=n_act))
    assert q_bf16.shape == (512, n_actions)
    assert q_bf16.dtype == jnp.float32
    assert jnp.allclose(q_bf16, ref_big, atol=5e-2, rtol=5e-2)

    # TODO(synk): the PyTorch module's Adam optimizer and save/load(state_dict)
    # are training/IO utilities, not part of the forward pass, and are omitted.
    print("KERNEL_OK")
</pallas_src>

<mosaic_0001>
module attributes {stable_mosaic.version = 11 : i64} {
  func.func @_dqn_fused_kernel(%arg0: i32, %arg1: memref<8x16xf32, #tpu.memory_space<vmem>>, %arg2: memref<16x128xf32, #tpu.memory_space<vmem>>, %arg3: memref<1x128xf32, #tpu.memory_space<vmem>>, %arg4: memref<128x128xf32, #tpu.memory_space<vmem>>, %arg5: memref<1x128xf32, #tpu.memory_space<vmem>>, %arg6: memref<128x128xf32, #tpu.memory_space<vmem>>, %arg7: memref<1x128xf32, #tpu.memory_space<vmem>>, %arg8: memref<8x4xf32, #tpu.memory_space<vmem>>) attributes {dimension_semantics = [#tpu.dimension_semantics<parallel>], iteration_bounds = array<i64: 1>, scalar_prefetch = 0 : i64, scratch_operands = 0 : i64, tpu.core_type = #tpu.core_type<tc>, window_params = [{transform_indices = @transform_0, window_bounds = array<i64: 8, 16>}, {pipeline_mode = #tpu.pipeline_mode<synchronous>, transform_indices = @transform_1, window_bounds = array<i64: 16, 128>}, {pipeline_mode = #tpu.pipeline_mode<synchronous>, transform_indices = @transform_2, window_bounds = array<i64: 1, 128>}, {pipeline_mode = #tpu.pipeline_mode<synchronous>, transform_indices = @transform_3, window_bounds = array<i64: 128, 128>}, {pipeline_mode = #tpu.pipeline_mode<synchronous>, transform_indices = @transform_4, window_bounds = array<i64: 1, 128>}, {pipeline_mode = #tpu.pipeline_mode<synchronous>, transform_indices = @transform_5, window_bounds = array<i64: 128, 128>}, {pipeline_mode = #tpu.pipeline_mode<synchronous>, transform_indices = @transform_6, window_bounds = array<i64: 1, 128>}, {transform_indices = @transform_7, window_bounds = array<i64: 8, 4>}]} {
    %c0 = arith.constant 0 : index
    %c0_0 = arith.constant 0 : index
    %0 = vector.load %arg1[%c0, %c0_0] : memref<8x16xf32, #tpu.memory_space<vmem>>, vector<8x16xf32>
    %c0_1 = arith.constant 0 : index
    %c0_2 = arith.constant 0 : index
    %1 = vector.load %arg2[%c0_1, %c0_2] : memref<16x128xf32, #tpu.memory_space<vmem>>, vector<16x128xf32>
    %cst = arith.constant dense<0.000000e+00> : vector<8x128xf32>
    %2 = tpu.matmul %0, %1, %cst {dimension_numbers = #tpu.dot_dimension_numbers<[1], [0], [0], [1], [0, 0, 1, 1], [], []>} : vector<8x16xf32>, vector<16x128xf32>, vector<8x128xf32> -> vector<8x128xf32>
    %c0_3 = arith.constant 0 : index
    %c0_4 = arith.constant 0 : index
    %3 = vector.load %arg3[%c0_3, %c0_4] : memref<1x128xf32, #tpu.memory_space<vmem>>, vector<1x128xf32>
    %4 = vector.broadcast %3 : vector<1x128xf32> to vector<8x128xf32>
    %5 = arith.addf %2, %4 : vector<8x128xf32>
    %cst_5 = arith.constant 0.000000e+00 : f32
    %6 = vector.broadcast %cst_5 : f32 to vector<8x128xf32>
    %7 = arith.maximumf %5, %6 : vector<8x128xf32>
    %c0_6 = arith.constant 0 : index
    %c0_7 = arith.constant 0 : index
    %8 = vector.load %arg4[%c0_6, %c0_7] : memref<128x128xf32, #tpu.memory_space<vmem>>, vector<128x128xf32>
    %cst_8 = arith.constant dense<0.000000e+00> : vector<8x128xf32>
    %9 = tpu.matmul %7, %8, %cst_8 {dimension_numbers = #tpu.dot_dimension_numbers<[1], [0], [0], [1], [0, 0, 1, 1], [], []>} : vector<8x128xf32>, vector<128x128xf32>, vector<8x128xf32> -> vector<8x128xf32>
    %c0_9 = arith.constant 0 : index
    %c0_10 = arith.constant 0 : index
    %10 = vector.load %arg5[%c0_9, %c0_10] : memref<1x128xf32, #tpu.memory_space<vmem>>, vector<1x128xf32>
    %11 = vector.broadcast %10 : vector<1x128xf32> to vector<8x128xf32>
    %12 = arith.addf %9, %11 : vector<8x128xf32>
    %cst_11 = arith.constant 0.000000e+00 : f32
    %13 = vector.broadcast %cst_11 : f32 to vector<8x128xf32>
    %14 = arith.maximumf %12, %13 : vector<8x128xf32>
    %c0_12 = arith.constant 0 : index
    %c0_13 = arith.constant 0 : index
    %15 = vector.load %arg6[%c0_12, %c0_13] : memref<128x128xf32, #tpu.memory_space<vmem>>, vector<128x128xf32>
    %cst_14 = arith.constant dense<0.000000e+00> : vector<8x128xf32>
    %16 = tpu.matmul %14, %15, %cst_14 {dimension_numbers = #tpu.dot_dimension_numbers<[1], [0], [0], [1], [0, 0, 1, 1], [], []>} : vector<8x128xf32>, vector<128x128xf32>, vector<8x128xf32> -> vector<8x128xf32>
    %c0_15 = arith.constant 0 : index
    %c0_16 = arith.constant 0 : index
    %17 = vector.load %arg7[%c0_15, %c0_16] : memref<1x128xf32, #tpu.memory_space<vmem>>, vector<1x128xf32>
    %18 = vector.broadcast %17 : vector<1x128xf32> to vector<8x128xf32>
    %19 = arith.addf %16, %18 : vector<8x128xf32>
    %20 = vector.extract_strided_slice %19 {offsets = [0, 0], sizes = [8, 4], strides = [1, 1]} : vector<8x128xf32> to vector<8x4xf32>
    %c0_17 = arith.constant 0 : index
    %c0_18 = arith.constant 0 : index
    %21 = vector.load %arg8[%c0_17, %c0_18] : memref<8x4xf32, #tpu.memory_space<vmem>>, vector<8x4xf32>
    tpu.vector_store %arg8[%c0_17, %c0_18], %20 {strides = array<i32>} : memref<8x4xf32, #tpu.memory_space<vmem>>, vector<8x4xf32>,
    return
  }
  func.func @transform_0(%arg0: i32) -> (i32, i32) {
    %c0_i32 = arith.constant 0 : i32
    %c0_i32_0 = arith.constant 0 : i32
    return %arg0, %c0_i32 : i32, i32
  }
  func.func @transform_1(%arg0: i32) -> (i32, i32) {
    %c0_i32 = arith.constant 0 : i32
    %c0_i32_0 = arith.constant 0 : i32
    %c0_i32_1 = arith.constant 0 : i32
    return %c0_i32, %c0_i32_0 : i32, i32
  }
  func.func @transform_2(%arg0: i32) -> (i32, i32) {
    %c0_i32 = arith.constant 0 : i32
    %c0_i32_0 = arith.constant 0 : i32
    %c0_i32_1 = arith.constant 0 : i32
    return %c0_i32, %c0_i32_0 : i32, i32
  }
  func.func @transform_3(%arg0: i32) -> (i32, i32) {
    %c0_i32 = arith.constant 0 : i32
    %c0_i32_0 = arith.constant 0 : i32
    %c0_i32_1 = arith.constant 0 : i32
    return %c0_i32, %c0_i32_0 : i32, i32
  }
  func.func @transform_4(%arg0: i32) -> (i32, i32) {
    %c0_i32 = arith.constant 0 : i32
    %c0_i32_0 = arith.constant 0 : i32
    %c0_i32_1 = arith.constant 0 : i32
    return %c0_i32, %c0_i32_0 : i32, i32
  }
  func.func @transform_5(%arg0: i32) -> (i32, i32) {
    %c0_i32 = arith.constant 0 : i32
    %c0_i32_0 = arith.constant 0 : i32
    %c0_i32_1 = arith.constant 0 : i32
    return %c0_i32, %c0_i32_0 : i32, i32
  }
  func.func @transform_6(%arg0: i32) -> (i32, i32) {
    %c0_i32 = arith.constant 0 : i32
    %c0_i32_0 = arith.constant 0 : i32
    %c0_i32_1 = arith.constant 0 : i32
    return %c0_i32, %c0_i32_0 : i32, i32
  }
  func.func @transform_7(%arg0: i32) -> (i32, i32) {
    %c0_i32 = arith.constant 0 : i32
    %c0_i32_0 = arith.constant 0 : i32
    return %arg0, %c0_i32 : i32, i32
  }
}

</mosaic_0001>

<llo_original>
// kernel: dqn_forward.1
$region0: #{dqn_forward.1}
  #allocation0 [shape = 'u32[]', space=smem, size = 0x4, offset = 0x4, fixed_abs, tag = 'smem constant byte address 0x4 - core index']
  #allocation1 [shape = 'u32[144,128]{1,0:T(1,128)}', space=vmem, size = 0x12000, scoped, tag = 'internal scratch']
  %s0 = inlined_call_operand.vmem [shape: f32[8,16], index: 0, kind: input, shape index: {}]
  %s1 = inlined_call_operand.hbm [shape: f32[16,128], index: 1, kind: input, shape index: {}]
  %s2 = inlined_call_operand.vmem [shape: f32[1,128], index: 2, kind: input, shape index: {}]
  %s3 = inlined_call_operand.hbm [shape: f32[128,128], index: 3, kind: input, shape index: {}]
  %s4 = inlined_call_operand.vmem [shape: f32[1,128], index: 4, kind: input, shape index: {}]
  %s5 = inlined_call_operand.hbm [shape: f32[128,128], index: 5, kind: input, shape index: {}]
  %s6 = inlined_call_operand.vmem [shape: f32[1,128], index: 6, kind: input, shape index: {}]
  %s7 = inlined_call_operand.vmem [shape: f32[8,4], index: 7, kind: output, shape index: {}]
  %s8 = sld [smem:[#allocation0]]
  $region50: #{dqn_forward.1} parent=0
    _
  %s10 = ssub.s32 1, %s8
  %s11 = scalar_select 0, %s10, %s8
  $region1: #{dqn_forward.1} parent=0
    #allocation2 [shape = 'u8[8192]{0}', space=vmem, size = 0x2000, scoped, tag = 'input window, operand 1, single buffered']
    #allocation3 [shape = 's32[1]{0}', space=sflag, size = 0x4, scoped, tag = 'scoped memory for dqn_forward.1']
    #allocation4 [shape = 'u8[65536]{0}', space=vmem, size = 0x10000, scoped, tag = 'input window, operand 3, single buffered']
    #allocation5 [shape = 's32[1]{0}', space=sflag, size = 0x4, scoped, tag = 'scoped memory for dqn_forward.1']
    #allocation6 [shape = 'u8[65536]{0}', space=vmem, size = 0x10000, scoped, tag = 'input window, operand 5, single buffered']
    %12 = vsyncpa [#allocation3], 0
    %13 = vsyncpa [#allocation5], 0
    // Predicated region
    $region2: #{dqn_forward.1} parent=1 // pred_check
      _
    $region3: #{dqn_forward.1} parent=1 // pred_check_branch
      %15 = sbr.rel (0) target = $region5
    $region4: #{dqn_forward.1} parent=1 // pred_region
      _
    $region5: #{dqn_forward.1} parent=1 // pred_fallthru
      _
    // Predicated region
    $region6: #{dqn_forward.1} parent=1 // pred_check
      _
    $region7: #{dqn_forward.1} parent=1 // pred_check_branch
      %17 = sbr.rel (0) target = $region9
    $region8: #{dqn_forward.1} parent=1 // pred_region
      %s19 = ssub.s32 256, 256
      %20 = vsyncadd [#allocation3], %s19
      %s21 = sshll.u32 [#allocation2], 4
      %s22 = int_to_ptr.vmem [resolvable:$true] %s21
      %27 = dma.hbm_to_vmem [thread:$0]  %s1, 256, %s22, [#allocation3], 128, 128, 8
    $region9: #{dqn_forward.1} parent=1 // pred_fallthru
      _
    // Predicated region
    $region10: #{dqn_forward.1} parent=1 // pred_check
      _
    $region11: #{dqn_forward.1} parent=1 // pred_check_branch
      %29 = sbr.rel (0) target = $region13
    $region12: #{dqn_forward.1} parent=1 // pred_region
      _
    $region13: #{dqn_forward.1} parent=1 // pred_fallthru
      _
    // Predicated region
    $region14: #{dqn_forward.1} parent=1 // pred_check
      _
    $region15: #{dqn_forward.1} parent=1 // pred_check_branch
      %31 = sbr.rel (0) target = $region17
    $region16: #{dqn_forward.1} parent=1 // pred_region
      %s33 = ssub.s32 2048, 2048
      %34 = vsyncadd [#allocation5], %s33
      %s35 = sshll.u32 [#allocation4], 4
      %s36 = int_to_ptr.vmem [resolvable:$true] %s35
      %41 = dma.hbm_to_vmem [thread:$0]  %s3, 2048, %s36, [#allocation5], 128, 128, 8
    $region17: #{dqn_forward.1} parent=1 // pred_fallthru
      _
    // Predicated region
    $region18: #{dqn_forward.1} parent=1 // pred_check
      _
    $region19: #{dqn_forward.1} parent=1 // pred_check_branch
      %43 = sbr.rel (0) target = $region21
    $region20: #{dqn_forward.1} parent=1 // pred_region
      _
    $region21: #{dqn_forward.1} parent=1 // pred_fallthru
      _
    // Predicated region
    $region22: #{dqn_forward.1} parent=1 // pred_check
      _
    $region23: #{dqn_forward.1} parent=1 // pred_check_branch
      %45 = sbr.rel (0) target = $region25
    $region24: #{dqn_forward.1} parent=1 // pred_region
      %s47 = ssub.s32 2048, 2048
      %48 = vsyncadd [#allocation5], %s47
      %s49 = sshll.u32 [#allocation6], 4
      %s50 = int_to_ptr.vmem [resolvable:$true] %s49
      %55 = dma.hbm_to_vmem [thread:$0]  %s5, 2048, %s50, [#allocation5], 128, 128, 8
    $region25: #{dqn_forward.1} parent=1 // pred_fallthru
      _
    // Predicated region
    $region26: #{dqn_forward.1} parent=1 // pred_check
      _
    $region27: #{dqn_forward.1} parent=1 // pred_check_branch
      %57 = sbr.rel (0) target = $region29
    $region28: #{dqn_forward.1} parent=1 // pred_region
      _
    $region29: #{dqn_forward.1} parent=1 // pred_fallthru
      _
    // Predicated region
    $region30: #{dqn_forward.1} parent=1 // pred_check
      _
    $region31: #{dqn_forward.1} parent=1 // pred_check_branch
      %59 = sbr.rel (0) target = $region33
    $region32: #{dqn_forward.1} parent=1 // pred_region
      %60 = dma.done [#allocation3], 256
    $region33: #{dqn_forward.1} parent=1 // pred_fallthru
      _
    // Predicated region
    $region34: #{dqn_forward.1} parent=1 // pred_check
      _
    $region35: #{dqn_forward.1} parent=1 // pred_check_branch
      %62 = sbr.rel (0) target = $region37
    $region36: #{dqn_forward.1} parent=1 // pred_region
      %63 = dma.done [#allocation5], 2048
    $region37: #{dqn_forward.1} parent=1 // pred_fallthru
      _
    // Predicated region
    $region38: #{dqn_forward.1} parent=1 // pred_check
      _
    $region39: #{dqn_forward.1} parent=1 // pred_check_branch
      %65 = sbr.rel (0) target = $region41
    $region40: #{dqn_forward.1} parent=1 // pred_region
      %66 = dma.done [#allocation5], 2048
    $region41: #{dqn_forward.1} parent=1 // pred_fallthru
      _
    %v67 = vld [vmem:[%s0] sm:$0xff]
    %v68 = vld [vmem:[#allocation2] sm:$0xff]
    %v69 = vld [vmem:[#allocation2 + $0x8] sm:$0xff]
    %v70 = vld [vmem:[%s2] sm:$0x1]
    %v72 = vlaneseq
    %v73 = vshrl.u32 %v72, 7
    %v74 = vsub.s32 0, %v73
    %v75 = vrot.slane %v70, %v74
    %vm77 = vcmask 130048
    %v79 = vsel %vm77, %v67, 0
    %81 = vmatprep.subr.mxu0 0.0
    %82 = vmatpush1.msra.mxu0 %v68
    %83 = vmatprep.subr.mxu0 0.0
    %84 = vmatpush1.msra.mxu0 %v69
    %85 = vmatprep.subr.mxu0 0.0
    %86 = vmatpush1.msra.mxu0 0.0
    %87 = vmatprep.subr.mxu0 0.0
    %88 = vmatpush1.msra.mxu0 0.0
    %89 = vmatprep.subr.mxu0 0.0
    %90 = vmatpush1.msra.mxu0 0.0
    %91 = vmatprep.subr.mxu0 0.0
    %92 = vmatpush1.msra.mxu0 0.0
    %93 = vmatprep.subr.mxu0 0.0
    %94 = vmatpush1.msra.mxu0 0.0
    %95 = vmatprep.subr.mxu0 0.0
    %96 = vmatpush1.msra.mxu0 0.0
    %97 = vmatprep.subr.mxu0 0.0
    %98 = vmatpush1.msra.mxu0 0.0
    %99 = vmatprep.subr.mxu0 0.0
    %100 = vmatpush1.msra.mxu0 0.0
    %101 = vmatprep.subr.mxu0 0.0
    %102 = vmatpush1.msra.mxu0 0.0
    %103 = vmatprep.subr.mxu0 0.0
    %104 = vmatpush1.msra.mxu0 0.0
    %105 = vmatprep.subr.mxu0 0.0
    %106 = vmatpush1.msra.mxu0 0.0
    %107 = vmatprep.subr.mxu0 0.0
    %108 = vmatpush1.msra.mxu0 0.0
    %109 = vmatprep.subr.mxu0 0.0
    %110 = vmatpush1.msra.mxu0 0.0
    %111 = vmatprep.subr.mxu0 0.0
    %112 = vmatpush1.msra.mxu0 0.0
    %113 = vmatprep.subr.mxu0 0.0
    %114 = vmatpush1.msra.mxu0 0.0
    %115 = vmatprep.subr.mxu0 0.0
    %116 = vmatpush1.msra.mxu0 0.0
    %117 = vmatprep.subr.mxu0 0.0
    %118 = vmatpush1.msra.mxu0 0.0
    %119 = vmatprep.subr.mxu0 0.0
    %120 = vmatpush1.msra.mxu0 0.0
    %121 = vmatprep.subr.mxu0 0.0
    %122 = vmatpush1.msra.mxu0 0.0
    %123 = vmatprep.subr.mxu0 0.0
    %124 = vmatpush1.msra.mxu0 0.0
    %125 = vmatprep.subr.mxu0 0.0
    %126 = vmatpush1.msra.mxu0 0.0
    %127 = vmatprep.subr.mxu0 0.0
    %128 = vmatpush1.msra.mxu0 0.0
    %129 = vmatprep.subr.mxu0 0.0
    %130 = vmatpush1.msra.mxu0 0.0
    %131 = vmatprep.subr.mxu0 0.0
    %132 = vmatpush1.msra.mxu0 0.0
    %133 = vmatprep.subr.mxu0 0.0
    %134 = vmatpush1.msra.mxu0 0.0
    %135 = vmatprep.subr.mxu0 0.0
    %136 = vmatpush1.msra.mxu0 0.0
    %137 = vmatprep.subr.mxu0 0.0
    %138 = vmatpush1.msra.mxu0 0.0
    %139 = vmatprep.subr.mxu0 0.0
    %140 = vmatpush1.msra.mxu0 0.0
    %141 = vmatprep.subr.mxu0 0.0
    %142 = vmatpush1.msra.mxu0 0.0
    %143 = vmatprep.subr.mxu0 0.0
    %144 = vmatpush1.msra.mxu0 0.0
    %145 = vmatprep.mubr.f32.mxu0 0.0
    %146 = vmatmul.mubr.f32.gmra.mrb[0].mxu0 %v79
    %v147 = vpop.f32.mrb[0].mxu0
    %v148 = vadd.f32 %v75, %v147
    %v149 = vpop.f32.mrb[0].mxu0
    %150 = vdwg.mxu0
    %v151 = vmax.f32 %v148, 0.0
    %v152 = vld [vmem:[#allocation4] sm:$0xff]
    %v153 = vld [vmem:[#allocation4 + $0x8] sm:$0xff]
    %v154 = vld [vmem:[#allocation4 + $0x10] sm:$0xff]
    %v155 = vld [vmem:[#allocation4 + $0x18] sm:$0xff]
    %v156 = vld [vmem:[#allocation4 + $0x20] sm:$0xff]
    %v157 = vld [vmem:[#allocation4 + $0x28] sm:$0xff]
    %v158 = vld [vmem:[#allocation4 + $0x30] sm:$0xff]
    %v159 = vld [vmem:[#allocation4 + $0x38] sm:$0xff]
    %v160 = vld [vmem:[#allocation4 + $0x40] sm:$0xff]
    %v161 = vld [vmem:[#allocation4 + $0x48] sm:$0xff]
    %v162 = vld [vmem:[#allocation4 + $0x50] sm:$0xff]
    %v163 = vld [vmem:[#allocation4 + $0x58] sm:$0xff]
    %v164 = vld [vmem:[#allocation4 + $0x60] sm:$0xff]
    %v165 = vld [vmem:[#allocation4 + $0x68] sm:$0xff]
    %v166 = vld [vmem:[#allocation4 + $0x70] sm:$0xff]
    %v167 = vld [vmem:[#allocation4 + $0x78] sm:$0xff]
    %v168 = vld [vmem:[%s4] sm:$0x1]
    %v170 = vlaneseq
    %v171 = vshrl.u32 %v170, 7
    %v172 = vsub.s32 0, %v171
    %v173 = vrot.slane %v168, %v172
    %175 = vmatprep.subr.mxu0 0.0
    %176 = vmatpush1.msra.mxu0 %v152
    %177 = vmatprep.subr.mxu0 0.0
    %178 = vmatpush1.msra.mxu0 %v153
    %179 = vmatprep.subr.mxu0 0.0
    %180 = vmatpush1.msra.mxu0 %v154
    %181 = vmatprep.subr.mxu0 0.0
    %182 = vmatpush1.msra.mxu0 %v155
    %183 = vmatprep.subr.mxu0 0.0
    %184 = vmatpush1.msra.mxu0 %v156
    %185 = vmatprep.subr.mxu0 0.0
    %186 = vmatpush1.msra.mxu0 %v157
    %187 = vmatprep.subr.mxu0 0.0
    %188 = vmatpush1.msra.mxu0 %v158
    %189 = vmatprep.subr.mxu0 0.0
    %190 = vmatpush1.msra.mxu0 %v159
    %191 = vmatprep.subr.mxu0 0.0
    %192 = vmatpush1.msra.mxu0 %v160
    %193 = vmatprep.subr.mxu0 0.0
    %194 = vmatpush1.msra.mxu0 %v161
    %195 = vmatprep.subr.mxu0 0.0
    %196 = vmatpush1.msra.mxu0 %v162
    %197 = vmatprep.subr.mxu0 0.0
    %198 = vmatpush1.msra.mxu0 %v163
    %199 = vmatprep.subr.mxu0 0.0
    %200 = vmatpush1.msra.mxu0 %v164
    %201 = vmatprep.subr.mxu0 0.0
    %202 = vmatpush1.msra.mxu0 %v165
    %203 = vmatprep.subr.mxu0 0.0
    %204 = vmatpush1.msra.mxu0 %v166
    %205 = vmatprep.subr.mxu0 0.0
    %206 = vmatpush1.msra.mxu0 %v167
    %207 = vmatprep.subr.mxu0 0.0
    %208 = vmatpush1.msra.mxu0 0.0
    %209 = vmatprep.subr.mxu0 0.0
    %210 = vmatpush1.msra.mxu0 0.0
    %211 = vmatprep.subr.mxu0 0.0
    %212 = vmatpush1.msra.mxu0 0.0
    %213 = vmatprep.subr.mxu0 0.0
    %214 = vmatpush1.msra.mxu0 0.0
    %215 = vmatprep.subr.mxu0 0.0
    %216 = vmatpush1.msra.mxu0 0.0
    %217 = vmatprep.subr.mxu0 0.0
    %218 = vmatpush1.msra.mxu0 0.0
    %219 = vmatprep.subr.mxu0 0.0
    %220 = vmatpush1.msra.mxu0 0.0
    %221 = vmatprep.subr.mxu0 0.0
    %222 = vmatpush1.msra.mxu0 0.0
    %223 = vmatprep.subr.mxu0 0.0
    %224 = vmatpush1.msra.mxu0 0.0
    %225 = vmatprep.subr.mxu0 0.0
    %226 = vmatpush1.msra.mxu0 0.0
    %227 = vmatprep.subr.mxu0 0.0
    %228 = vmatpush1.msra.mxu0 0.0
    %229 = vmatprep.subr.mxu0 0.0
    %230 = vmatpush1.msra.mxu0 0.0
    %231 = vmatprep.subr.mxu0 0.0
    %232 = vmatpush1.msra.mxu0 0.0
    %233 = vmatprep.subr.mxu0 0.0
    %234 = vmatpush1.msra.mxu0 0.0
    %235 = vmatprep.subr.mxu0 0.0
    %236 = vmatpush1.msra.mxu0 0.0
    %237 = vmatprep.subr.mxu0 0.0
    %238 = vmatpush1.msra.mxu0 0.0
    %239 = vmatprep.mubr.f32.mxu0 0.0
    %240 = vmatmul.mubr.f32.gmra.mrb[0].mxu0 %v151
    %v241 = vpop.f32.mrb[0].mxu0
    %v242 = vadd.f32 %v173, %v241
    %v243 = vpop.f32.mrb[0].mxu0
    %244 = vdwg.mxu0
    %v245 = vmax.f32 %v242, 0.0
    %v246 = vld [vmem:[#allocation6] sm:$0xff]
    %v247 = vld [vmem:[#allocation6 + $0x8] sm:$0xff]
    %v248 = vld [vmem:[#allocation6 + $0x10] sm:$0xff]
    %v249 = vld [vmem:[#allocation6 + $0x18] sm:$0xff]
    %v250 = vld [vmem:[#allocation6 + $0x20] sm:$0xff]
    %v251 = vld [vmem:[#allocation6 + $0x28] sm:$0xff]
    %v252 = vld [vmem:[#allocation6 + $0x30] sm:$0xff]
    %v253 = vld [vmem:[#allocation6 + $0x38] sm:$0xff]
    %v254 = vld [vmem:[#allocation6 + $0x40] sm:$0xff]
    %v255 = vld [vmem:[#allocation6 + $0x48] sm:$0xff]
    %v256 = vld [vmem:[#allocation6 + $0x50] sm:$0xff]
    %v257 = vld [vmem:[#allocation6 + $0x58] sm:$0xff]
    %v258 = vld [vmem:[#allocation6 + $0x60] sm:$0xff]
    %v259 = vld [vmem:[#allocation6 + $0x68] sm:$0xff]
    %v260 = vld [vmem:[#allocation6 + $0x70] sm:$0xff]
    %v261 = vld [vmem:[#allocation6 + $0x78] sm:$0xff]
    %v262 = vld [vmem:[%s6] sm:$0x1]
    %v264 = vlaneseq
    %v265 = vshrl.u32 %v264, 7
    %v266 = vsub.s32 0, %v265
    %v267 = vrot.slane %v262, %v266
    %269 = vmatprep.subr.mxu0 0.0
    %270 = vmatpush1.msra.mxu0 %v246
    %271 = vmatprep.subr.mxu0 0.0
    %272 = vmatpush1.msra.mxu0 %v247
    %273 = vmatprep.subr.mxu0 0.0
    %274 = vmatpush1.msra.mxu0 %v248
    %275 = vmatprep.subr.mxu0 0.0
    %276 = vmatpush1.msra.mxu0 %v249
    %277 = vmatprep.subr.mxu0 0.0
    %278 = vmatpush1.msra.mxu0 %v250
    %279 = vmatprep.subr.mxu0 0.0
    %280 = vmatpush1.msra.mxu0 %v251
    %281 = vmatprep.subr.mxu0 0.0
    %282 = vmatpush1.msra.mxu0 %v252
    %283 = vmatprep.subr.mxu0 0.0
    %284 = vmatpush1.msra.mxu0 %v253
    %285 = vmatprep.subr.mxu0 0.0
    %286 = vmatpush1.msra.mxu0 %v254
    %287 = vmatprep.subr.mxu0 0.0
    %288 = vmatpush1.msra.mxu0 %v255
    %289 = vmatprep.subr.mxu0 0.0
    %290 = vmatpush1.msra.mxu0 %v256
    %291 = vmatprep.subr.mxu0 0.0
    %292 = vmatpush1.msra.mxu0 %v257
    %293 = vmatprep.subr.mxu0 0.0
    %294 = vmatpush1.msra.mxu0 %v258
    %295 = vmatprep.subr.mxu0 0.0
    %296 = vmatpush1.msra.mxu0 %v259
    %297 = vmatprep.subr.mxu0 0.0
    %298 = vmatpush1.msra.mxu0 %v260
    %299 = vmatprep.subr.mxu0 0.0
    %300 = vmatpush1.msra.mxu0 %v261
    %301 = vmatprep.subr.mxu0 0.0
    %302 = vmatpush1.msra.mxu0 0.0
    %303 = vmatprep.subr.mxu0 0.0
    %304 = vmatpush1.msra.mxu0 0.0
    %305 = vmatprep.subr.mxu0 0.0
    %306 = vmatpush1.msra.mxu0 0.0
    %307 = vmatprep.subr.mxu0 0.0
    %308 = vmatpush1.msra.mxu0 0.0
    %309 = vmatprep.subr.mxu0 0.0
    %310 = vmatpush1.msra.mxu0 0.0
    %311 = vmatprep.subr.mxu0 0.0
    %312 = vmatpush1.msra.mxu0 0.0
    %313 = vmatprep.subr.mxu0 0.0
    %314 = vmatpush1.msra.mxu0 0.0
    %315 = vmatprep.subr.mxu0 0.0
    %316 = vmatpush1.msra.mxu0 0.0
    %317 = vmatprep.subr.mxu0 0.0
    %318 = vmatpush1.msra.mxu0 0.0
    %319 = vmatprep.subr.mxu0 0.0
    %320 = vmatpush1.msra.mxu0 0.0
    %321 = vmatprep.subr.mxu0 0.0
    %322 = vmatpush1.msra.mxu0 0.0
    %323 = vmatprep.subr.mxu0 0.0
    %324 = vmatpush1.msra.mxu0 0.0
    %325 = vmatprep.subr.mxu0 0.0
    %326 = vmatpush1.msra.mxu0 0.0
    %327 = vmatprep.subr.mxu0 0.0
    %328 = vmatpush1.msra.mxu0 0.0
    %329 = vmatprep.subr.mxu0 0.0
    %330 = vmatpush1.msra.mxu0 0.0
    %331 = vmatprep.subr.mxu0 0.0
    %332 = vmatpush1.msra.mxu0 0.0
    %333 = vmatprep.mubr.f32.mxu0 0.0
    %334 = vmatmul.mubr.f32.gmra.mrb[0].mxu0 %v245
    %v335 = vpop.f32.mrb[0].mxu0
    %v336 = vadd.f32 %v267, %v335
    %v337 = vpop.f32.mrb[0].mxu0
    %338 = vdwg.mxu0
    %vm339 = vcmask 31744
    %340 = vst.msk [vmem:[%s7] sm:$0xff] %vm339, %v336
    // Predicated region
    $region42: #{dqn_forward.1} parent=1 // pred_check
      _
    $region43: #{dqn_forward.1} parent=1 // pred_check_branch
      %342 = sbr.rel (0) target = $region45
    $region44: #{dqn_forward.1} parent=1 // pred_region
      _
    $region45: #{dqn_forward.1} parent=1 // pred_fallthru
      _
    // Predicated region
    $region46: #{dqn_forward.1} parent=1 // pred_check
      _
    $region47: #{dqn_forward.1} parent=1 // pred_check_branch
      %344 = sbr.rel (0) target = $region49
    $region48: #{dqn_forward.1} parent=1 // pred_region
      _
    $region49: #{dqn_forward.1} parent=1 // pred_fallthru
      _
    %345 = vsyncpa [#allocation3], 1
    %346 = vsyncpa [#allocation5], 1

</llo_original>
